<compile_context>
chip_gen: v7x
topology: tpu7x:2x2x1
jax: 0.10.0
libtpu: 0.0.40
codegen_flags: <defaults>
</compile_context>

<pallas_src>
import functools

import jax
import jax.numpy as jnp
from jax.experimental import pallas as pl
from jax.experimental.pallas import tpu as pltpu


@functools.lru_cache(maxsize=1)
def _tensorcores_per_chip():
    """Best-effort TensorCores-per-chip (2 on v7x, 1 on v5e/v6e).  Falls back
    to 1 if the query is unavailable, which simply disables the v7x-only
    tile-splitting heuristic (the desired behavior on v5e/v6e anyway)."""
    try:
        info = pltpu.get_tpu_info()
    except Exception:
        return 1
    for attr in ("num_cores", "core_count", "num_tensorcores",
                 "tensorcore_count", "cores_per_chip"):
        n = getattr(info, attr, None)
        if isinstance(n, int) and 1 <= n <= 8:
            return n
    return 1


# ----------------------------------------------------------------------------
# Pallas MLP kernel (feature-major): lanes are queries, sublanes are features.
# ----------------------------------------------------------------------------
def _inr_mlp_kernel(num_layers, x_ref, coord_ref, *refs):
    """MLP over one (features, queries) tile.

    The last query tile may be ragged: out-of-range lanes hold undefined data
    and are masked on the output store.  Every op below is strictly per-lane —
    do NOT add cross-lane reductions / rolls over the query axis here.
    """
    o_ref = refs[-1]
    p = refs[:-1]  # [w0_feat, w0_coord, b0_eff, w1, b1, ..., w_out, b_out]

    # Layer 0 feature term on the MXU (bf16 operands, f32 accumulation).
    # jnp.dot(W(dout,din), X(din,T)) is the canonical MXU orientation; no
    # weight transpose expected in the lowering (weights are resident anyway).
    acc = jnp.dot(p[0][...], x_ref[...], preferred_element_type=jnp.float32)

    # Layer 0 coord term on the VPU in full f32 (two broadcast mul-adds):
    # keeps the K=2 contraction off the MXU push slot and keeps positional
    # inputs at f32 precision.  Constant cell rows are pre-folded into p[2].
    w0c = p[1][...]                       # (d0, 2) f32
    coords = coord_ref[...]               # (2, T)  f32
    acc = (acc
           + w0c[:, 0:1] * coords[0:1, :]
           + w0c[:, 1:2] * coords[1:2, :]
           + p[2][...])                   # bias (d0, 1) broadcasts over lanes

    k = 3
    for _ in range(num_layers - 1):
        w = p[k][...]
        h = jnp.maximum(acc, 0.0).astype(w.dtype)   # ReLU in f32, matmul in bf16
        acc = jnp.dot(w, h, preferred_element_type=jnp.float32) + p[k + 1][...]
        k += 2

    o_ref[...] = acc.astype(o_ref.dtype)            # lane-dense (out_dim, T) store


def inr_mlp_pallas(x_feat, coord_rows, params, *, out_dim, tile_n=8192,
                   out_dtype=jnp.float32):
    """x_feat: (b, c*9, Q) compute-dtype.  coord_rows: (2, Q) f32.
    params: [w0_feat bf16 (d0,c9), w0_coord f32 (d0,2), b0_eff f32 (d0,1),
             w1 bf16, b1 f32, ..., w_out bf16, b_out f32].
    Returns (b, out_dim, Q) out_dtype."""
    b, c9, q = x_feat.shape
    num_layers = (len(params) - 1) // 2

    # ---- query-axis (lane) tile size ----------------------------------------
    # Big tiles amortize the fixed per-grid-step cost; cap only by Q (rounded
    # up so lanes stay unmasked for full tiles) and a soft VMEM budget.
    itemsize = x_feat.dtype.itemsize
    max_width = max(int(p.shape[0]) for p in params)
    bytes_per_lane = (2 * c9 * itemsize        # x_feat tile, double-buffered
                      + 2 * 2 * 4              # coord rows f32, double-buffered
                      + 2 * out_dim * 4        # output tile, double-buffered
                      + 2 * max_width * 4      # live f32 activations
                      + max_width * itemsize)  # bf16 cast of the activation
    vmem_cap = max(128, ((20 * 1024 * 1024) // max(bytes_per_lane, 1)) // 128 * 128)
    q_cap = ((q + 127) // 128) * 128
    tile_n = max(128, (min(tile_n, vmem_cap, q_cap) // 128) * 128)

    n_tiles = pl.cdiv(q, tile_n)
    num_tc = _tensorcores_per_chip()
    if num_tc > 1 and (b * n_tiles) % num_tc != 0:
        # v7x only (2 TensorCores/chip): prefer a total step count divisible by
        # the core count so megacore sharding does not leave a core idle.
        for cand in range(n_tiles, pl.cdiv(q, 128) + 1):
            if (b * cand) % num_tc == 0:
                tile_n = max(128, ((pl.cdiv(q, cand) + 127) // 128) * 128)
                n_tiles = pl.cdiv(q, tile_n)
                break

    # Grid is (query_tiles, batch): coord_rows' block index is constant across
    # the inner batch loop (no re-DMA); weights/biases are resident throughout.
    in_specs = [
        pl.BlockSpec((pl.Squeezed(), c9, tile_n), lambda qi, bi: (bi, 0, qi)),
        pl.BlockSpec((2, tile_n), lambda qi, bi: (0, qi)),
    ]
    in_specs += [pl.BlockSpec(p.shape, lambda qi, bi: (0, 0)) for p in params]

    # TODO(synk): optional fp8(e4m3) x_feat / hidden weights on v7x (f32 acc)
    # would halve the dominant HBM stream if a bundle dump shows exposed DMA.
    return pl.pallas_call(
        functools.partial(_inr_mlp_kernel, num_layers),
        out_shape=jax.ShapeDtypeStruct((b, out_dim, q), out_dtype),
        grid_spec=pltpu.PrefetchScalarGridSpec(
            num_scalar_prefetch=0,
            grid=(n_tiles, b),
            in_specs=in_specs,
            out_specs=pl.BlockSpec((pl.Squeezed(), out_dim, tile_n),
                                   lambda qi, bi: (bi, 0, qi)),
        ),
        compiler_params=pltpu.CompilerParams(
            dimension_semantics=("parallel", "parallel")),
    )(x_feat, coord_rows, *params)


# ----------------------------------------------------------------------------
# Plain-JAX glue: make_coord / make_cell, and a gather-free separable resample
# equivalent to F.unfold(3, pad=1) + F.grid_sample(bilinear, zeros).
# ----------------------------------------------------------------------------
def make_coord(shape):
    # Pixel-center coords in [-1, 1], same as LIIF's make_coord (ij meshgrid).
    seqs = []
    for n in shape:
        r = 1.0 / n
        seqs.append(-1.0 + r + 2.0 * r * jnp.arange(n, dtype=jnp.float32))
    g = jnp.stack(jnp.meshgrid(*seqs, indexing="ij"), axis=-1)
    return g.reshape(-1, len(shape))  # (Q, 2): [:,0]=row(y), [:,1]=col(x)


def make_cell(shape):
    coord = make_coord(shape)
    cell = jnp.ones_like(coord)
    cell = cell.at[:, 0].multiply(2.0 / shape[0])
    cell = cell.at[:, 1].multiply(2.0 / shape[1])
    return cell


def _bilinear_tap_matrices(n_out, n_in):
    """(3, n_out, n_in+2) dense interpolation matrices acting on the 1-padded
    input axis, one per 3x3-unfold tap shift, with grid_sample
    (align_corners=False, padding_mode='zeros') semantics baked in."""
    r = jnp.arange(n_out, dtype=jnp.float32)
    g = -1.0 + (2.0 * r + 1.0) / n_out               # pixel-center grid coord
    pos = ((g + 1.0) * n_in - 1.0) * 0.5             # continuous input index
    i0 = jnp.floor(pos)
    w1 = pos - i0
    w0 = 1.0 - w1
    i0i = i0.astype(jnp.int32)
    cols = jnp.arange(n_in, dtype=jnp.int32)
    v0 = ((i0i >= 0) & (i0i < n_in)).astype(jnp.float32)        # zeros padding
    v1 = ((i0i + 1 >= 0) & (i0i + 1 < n_in)).astype(jnp.float32)
    m = ((cols[None, :] == i0i[:, None]).astype(jnp.float32) * (w0 * v0)[:, None]
         + (cols[None, :] == (i0i + 1)[:, None]).astype(jnp.float32) * (w1 * v1)[:, None])
    # Shift by the unfold tap offset k on the 1-padded axis.
    return jnp.stack([jnp.pad(m, ((0, 0), (k, 2 - k))) for k in range(3)], axis=0)


def sample_unfolded(h, shape_out):
    """Equivalent to grid_sample(unfold3x3(h), coord.flip(-1), bilinear,
    align_corners=False, zeros) at the regular pixel-center grid of shape_out,
    computed as separable dense interpolation matmuls (no gathers).
    Returns feature-major (b, c*9, Ho*Wo) f32."""
    b, c, H, W = h.shape
    Ho, Wo = shape_out
    Wy = _bilinear_tap_matrices(Ho, H)   # (3, Ho, H+2)
    Wx = _bilinear_tap_matrices(Wo, W)   # (3, Wo, W+2)
    hp = jnp.pad(h, ((0, 0), (0, 0), (1, 1), (1, 1)))   # unfold's zero padding
    x = jnp.einsum("iry,bcyx,jsx->bcijrs", Wy, hp, Wx,
                   precision=jax.lax.Precision.HIGHEST)
    # Channel order (c, ky, kx) matches F.unfold; query order (r, s) row-major
    # matches make_coord's flattening.
    return x.reshape(b, c * 9, Ho * Wo)


# Gather-based references (verification only).
def unfold3x3(h):
    b, c, H, W = h.shape
    hp = jnp.pad(h, ((0, 0), (0, 0), (1, 1), (1, 1)))
    patches = []
    for ky in range(3):
        for kx in range(3):
            patches.append(hp[:, :, ky:ky + H, kx:kx + W])
    return jnp.stack(patches, axis=2).reshape(b, c * 9, H, W)


def grid_sample_bilinear_zeros(feat, gx, gy):
    b, C, H, W = feat.shape
    ix = ((gx + 1.0) * W - 1.0) / 2.0
    iy = ((gy + 1.0) * H - 1.0) / 2.0
    x0 = jnp.floor(ix)
    y0 = jnp.floor(iy)
    wx1, wy1 = ix - x0, iy - y0
    wx0, wy0 = 1.0 - wx1, 1.0 - wy1
    feat_flat = feat.reshape(b, C, H * W)

    def corner(xf, yf, w):
        xi, yi = xf.astype(jnp.int32), yf.astype(jnp.int32)
        valid = (xi >= 0) & (xi <= W - 1) & (yi >= 0) & (yi <= H - 1)
        idx = jnp.clip(yi, 0, H - 1) * W + jnp.clip(xi, 0, W - 1)
        v = jnp.take(feat_flat, idx, axis=2)
        return v * (w * valid.astype(feat.dtype))[None, None, :]

    return (corner(x0, y0, wx0 * wy0) + corner(x0 + 1.0, y0, wx1 * wy0)
            + corner(x0, y0 + 1.0, wx0 * wy1) + corner(x0 + 1.0, y0 + 1.0, wx1 * wy1))


# ----------------------------------------------------------------------------
# InrNet
# ----------------------------------------------------------------------------
class InrNetPallas:
    def __init__(self, in_dim, out_dim, hidden_list, key,
                 compute_dtype=jnp.bfloat16, tile_n=8192, out_dtype=jnp.float32):
        self.in_dim = in_dim
        self.out_dim = out_dim
        self.hidden_list = list(hidden_list)
        self.compute_dtype = compute_dtype
        self.out_dtype = out_dtype      # bf16 is a cheap writeback saving on v5e
        self.tile_n = tile_n
        last_dim = in_dim * 9 + 2 + 2
        self.weights = []   # PyTorch layout (d_out, d_in), f32 master copy
        self.biases = []    # (d_out, 1) f32
        for d in self.hidden_list + [out_dim]:
            key, k1, k2 = jax.random.split(key, 3)
            bound = 1.0 / (last_dim ** 0.5)   # nn.Linear default init range
            self.weights.append(
                jax.random.uniform(k1, (d, last_dim), jnp.float32, -bound, bound))
            self.biases.append(
                jax.random.uniform(k2, (d, 1), jnp.float32, -bound, bound))
            last_dim = d

    def _packed_params(self, c9, cell_y, cell_x):
        cd = self.compute_dtype
        w0 = self.weights[0]
        # Fold the two constant (per-call) cell inputs into the layer-0 bias.
        b0_eff = (self.biases[0]
                  + w0[:, c9 + 2:c9 + 3] * cell_y
                  + w0[:, c9 + 3:c9 + 4] * cell_x)
        params = [w0[:, :c9].astype(cd),   # bf16 feature weights (MXU path)
                  w0[:, c9:c9 + 2],        # f32 coord weights   (VPU path)
                  b0_eff]
        for w, bb in zip(self.weights[1:], self.biases[1:]):
            params.append(w.astype(cd))
            params.append(bb)
        return params

    def __call__(self, h, shape):
        b, c, H, W = h.shape
        Ho, Wo = shape
        c9 = c * 9

        coord = make_coord(shape)                      # (Q, 2) f32, [:,0]=y [:,1]=x
        x_feat = sample_unfolded(h, shape)             # (b, c*9, Q) f32, gather-free
        coord_rows = coord.T                           # (2, Q) f32, stays f32 in-kernel

        params = self._packed_params(c9, cell_y=2.0 * H / Ho, cell_x=2.0 * W / Wo)
        pred = inr_mlp_pallas(x_feat.astype(self.compute_dtype), coord_rows, params,
                              out_dim=self.out_dim, tile_n=self.tile_n,
                              out_dtype=self.out_dtype)   # (b, out_dim, Q)
        return pred.reshape(b, self.out_dim, Ho, Wo)       # no permute needed


# ----------------------------------------------------------------------------
# Pure-JAX references for verification
# ----------------------------------------------------------------------------
def mlp_reference_feature_major(net, x_feat_f32, coord_rows, cell_y, cell_x):
    """Plain-JAX mirror of the Pallas kernel math (same cast / fold points)."""
    cd = net.compute_dtype
    c9 = x_feat_f32.shape[1]
    w0 = net.weights[0]
    b0_eff = (net.biases[0] + w0[:, c9 + 2:c9 + 3] * cell_y
              + w0[:, c9 + 3:c9 + 4] * cell_x)
    acc = jnp.einsum("oi,biq->boq", w0[:, :c9].astype(cd), x_feat_f32.astype(cd),
                     preferred_element_type=jnp.float32)
    w0c = w0[:, c9:c9 + 2]
    coord_term = (w0c[:, 0:1] * coord_rows[0:1, :]
                  + w0c[:, 1:2] * coord_rows[1:2, :])
    acc = acc + coord_term[None] + b0_eff[None]
    for w, bb in zip(net.weights[1:], net.biases[1:]):
        hcd = jnp.maximum(acc, 0.0).astype(cd)
        acc = jnp.einsum("oi,biq->boq", w.astype(cd), hcd,
                         preferred_element_type=jnp.float32) + bb[None]
    return acc                                            # (b, out_dim, Q) f32


def forward_reference_f32(net, h, shape):
    """End-to-end f32 reference following the PyTorch forward literally."""
    b, c, H, W = h.shape
    Ho, Wo = shape
    Q = Ho * Wo
    coord = make_coord(shape)
    cell = make_cell(shape)
    feat = unfold3x3(h)
    sampled = jnp.transpose(
        grid_sample_bilinear_zeros(feat, coord[:, 1], coord[:, 0]), (0, 2, 1))
    cell_s = cell * jnp.array([H, W], jnp.float32)
    inp = jnp.concatenate(
        [sampled,
         jnp.broadcast_to(coord[None], (b, Q, 2)),
         jnp.broadcast_to(cell_s[None], (b, Q, 2))], axis=-1)
    z = inp.reshape(b * Q, -1)
    for w, bb in zip(net.weights[:-1], net.biases[:-1]):
        z = jnp.maximum(z @ w.T + bb[:, 0], 0.0)
    z = z @ net.weights[-1].T + net.biases[-1][:, 0]
    z = z.reshape(b, Q, -1)
    return jnp.transpose(z, (0, 2, 1)).reshape(b, net.out_dim, Ho, Wo)


if __name__ == "__main__":
    key = jax.random.PRNGKey(0)
    k_inp, k_par = jax.random.split(key)

    b, c, H, W = 2, 4, 16, 16
    shape = (16, 16)
    hidden_list = [32, 32]
    out_dim = 3

    h = jax.random.normal(k_inp, (b, c, H, W), dtype=jnp.float32)
    net = InrNetPallas(in_dim=c, out_dim=out_dim, hidden_list=hidden_list, key=k_par)

    fwd = jax.jit(net.__call__, static_argnums=1)
    out = jax.block_until_ready(fwd(h, shape))
    assert out.shape == (b, out_dim, *shape), out.shape

    # check 1: separable-matmul resample == unfold3x3 + grid_sample (exact math).
    coord = make_coord(shape)
    ref_sampled = grid_sample_bilinear_zeros(unfold3x3(h), coord[:, 1], coord[:, 0])
    fused_sampled = sample_unfolded(h, shape)
    assert jnp.allclose(fused_sampled, ref_sampled, atol=1e-5, rtol=1e-5)

    # check 2 (tight): Pallas kernel vs bf16-matched plain-JAX MLP.
    cell_y, cell_x = 2.0 * H / shape[0], 2.0 * W / shape[1]
    ref_mlp = mlp_reference_feature_major(net, fused_sampled, coord.T, cell_y, cell_x)
    ref_mlp = ref_mlp.reshape(b, out_dim, *shape)
    assert jnp.allclose(out, ref_mlp, atol=2e-3, rtol=2e-3), \
        float(jnp.max(jnp.abs(out - ref_mlp)))

    # check 3 (loose, bf16 quantization only): full forward vs f32 reference.
    ref_f32 = forward_reference_f32(net, h, shape)
    assert jnp.allclose(out, ref_f32, atol=2e-1, rtol=2e-1), \
        float(jnp.max(jnp.abs(out - ref_f32)))

    # check 4: downsampled output resolution (ragged query tile).
    shape2 = (12, 16)
    out2 = jax.block_until_ready(fwd(h, shape2))
    ref2 = forward_reference_f32(net, h, shape2)
    assert out2.shape == (b, out_dim, *shape2), out2.shape
    assert jnp.allclose(out2, ref2, atol=2e-1, rtol=2e-1), \
        float(jnp.max(jnp.abs(out2 - ref2)))

    # check 5: upsampled output (exercises grid_sample zero-padding at borders).
    shape3 = (24, 20)
    coord3 = make_coord(shape3)
    ref_s3 = grid_sample_bilinear_zeros(unfold3x3(h), coord3[:, 1], coord3[:, 0])
    assert jnp.allclose(sample_unfolded(h, shape3), ref_s3, atol=1e-5, rtol=1e-5)
    out3 = jax.block_until_ready(fwd(h, shape3))
    ref3 = forward_reference_f32(net, h, shape3)
    assert out3.shape == (b, out_dim, *shape3), out3.shape
    assert jnp.allclose(out3, ref3, atol=2e-1, rtol=2e-1), \
        float(jnp.max(jnp.abs(out3 - ref3)))

    print("KERNEL_OK")
</pallas_src>

<mosaic_0001>
module attributes {stable_mosaic.version = 11 : i64} {
  func.func @_inr_mlp_kernel(%arg0: i32, %arg1: i32, %arg2: memref<1x36x256xbf16, #tpu.memory_space<vmem>>, %arg3: memref<2x256xf32, #tpu.memory_space<vmem>>, %arg4: memref<32x36xbf16, #tpu.memory_space<vmem>>, %arg5: memref<32x2xf32, #tpu.memory_space<vmem>>, %arg6: memref<32x1xf32, #tpu.memory_space<vmem>>, %arg7: memref<32x32xbf16, #tpu.memory_space<vmem>>, %arg8: memref<32x1xf32, #tpu.memory_space<vmem>>, %arg9: memref<3x32xbf16, #tpu.memory_space<vmem>>, %arg10: memref<3x1xf32, #tpu.memory_space<vmem>>, %arg11: memref<1x3x256xf32, #tpu.memory_space<vmem>>) attributes {dimension_semantics = [#tpu.dimension_semantics<parallel>, #tpu.dimension_semantics<parallel>], iteration_bounds = array<i64: 1, 2>, scalar_prefetch = 0 : i64, scratch_operands = 0 : i64, tpu.core_type = #tpu.core_type<tc>, window_params = [{transform_indices = @transform_0, window_bounds = array<i64: 1, 36, 256>}, {transform_indices = @transform_1, window_bounds = array<i64: 2, 256>}, {pipeline_mode = #tpu.pipeline_mode<synchronous>, transform_indices = @transform_2, window_bounds = array<i64: 32, 36>}, {pipeline_mode = #tpu.pipeline_mode<synchronous>, transform_indices = @transform_3, window_bounds = array<i64: 32, 2>}, {pipeline_mode = #tpu.pipeline_mode<synchronous>, transform_indices = @transform_4, window_bounds = array<i64: 32, 1>}, {pipeline_mode = #tpu.pipeline_mode<synchronous>, transform_indices = @transform_5, window_bounds = array<i64: 32, 32>}, {pipeline_mode = #tpu.pipeline_mode<synchronous>, transform_indices = @transform_6, window_bounds = array<i64: 32, 1>}, {pipeline_mode = #tpu.pipeline_mode<synchronous>, transform_indices = @transform_7, window_bounds = array<i64: 3, 32>}, {pipeline_mode = #tpu.pipeline_mode<synchronous>, transform_indices = @transform_8, window_bounds = array<i64: 3, 1>}, {transform_indices = @transform_9, window_bounds = array<i64: 1, 3, 256>}]} {
    %c0 = arith.constant 0 : index
    %c0_0 = arith.constant 0 : index
    %0 = vector.load %arg4[%c0, %c0_0] : memref<32x36xbf16, #tpu.memory_space<vmem>>, vector<32x36xbf16>
    %c0_1 = arith.constant 0 : index
    %c0_2 = arith.constant 0 : index
    %c0_3 = arith.constant 0 : index
    %1 = vector.load %arg2[%c0_1, %c0_2, %c0_3] : memref<1x36x256xbf16, #tpu.memory_space<vmem>>, vector<1x36x256xbf16>
    %2 = vector.shape_cast %1 : vector<1x36x256xbf16> to vector<36x256xbf16>
    %cst = arith.constant dense<0.000000e+00> : vector<32x256xf32>
    %3 = tpu.matmul %0, %2, %cst {dimension_numbers = #tpu.dot_dimension_numbers<[1], [0], [0], [1], [0, 0, 1, 1], [], []>} : vector<32x36xbf16>, vector<36x256xbf16>, vector<32x256xf32> -> vector<32x256xf32>
    %c0_4 = arith.constant 0 : index
    %c0_5 = arith.constant 0 : index
    %4 = vector.load %arg5[%c0_4, %c0_5] : memref<32x2xf32, #tpu.memory_space<vmem>>, vector<32x2xf32>
    %c0_6 = arith.constant 0 : index
    %c0_7 = arith.constant 0 : index
    %5 = vector.load %arg3[%c0_6, %c0_7] : memref<2x256xf32, #tpu.memory_space<vmem>>, vector<2x256xf32>
    %6 = vector.extract_strided_slice %4 {offsets = [0, 0], sizes = [32, 1], strides = [1, 1]} : vector<32x2xf32> to vector<32x1xf32>
    %7 = vector.extract_strided_slice %5 {offsets = [0, 0], sizes = [1, 256], strides = [1, 1]} : vector<2x256xf32> to vector<1x256xf32>
    %8 = vector.broadcast %6 : vector<32x1xf32> to vector<32x256xf32>
    %9 = vector.broadcast %7 : vector<1x256xf32> to vector<32x256xf32>
    %10 = arith.mulf %8, %9 : vector<32x256xf32>
    %11 = arith.addf %3, %10 : vector<32x256xf32>
    %12 = vector.extract_strided_slice %4 {offsets = [0, 1], sizes = [32, 1], strides = [1, 1]} : vector<32x2xf32> to vector<32x1xf32>
    %13 = vector.extract_strided_slice %5 {offsets = [1, 0], sizes = [1, 256], strides = [1, 1]} : vector<2x256xf32> to vector<1x256xf32>
    %14 = vector.broadcast %12 : vector<32x1xf32> to vector<32x256xf32>
    %15 = vector.broadcast %13 : vector<1x256xf32> to vector<32x256xf32>
    %16 = arith.mulf %14, %15 : vector<32x256xf32>
    %17 = arith.addf %11, %16 : vector<32x256xf32>
    %c0_8 = arith.constant 0 : index
    %c0_9 = arith.constant 0 : index
    %18 = vector.load %arg6[%c0_8, %c0_9] : memref<32x1xf32, #tpu.memory_space<vmem>>, vector<32x1xf32>
    %19 = vector.broadcast %18 : vector<32x1xf32> to vector<32x256xf32>
    %20 = arith.addf %17, %19 : vector<32x256xf32>
    %c0_10 = arith.constant 0 : index
    %c0_11 = arith.constant 0 : index
    %21 = vector.load %arg7[%c0_10, %c0_11] : memref<32x32xbf16, #tpu.memory_space<vmem>>, vector<32x32xbf16>
    %cst_12 = arith.constant 0.000000e+00 : f32
    %22 = vector.broadcast %cst_12 : f32 to vector<32x256xf32>
    %23 = arith.maximumf %20, %22 : vector<32x256xf32>
    %24 = arith.truncf %23 : vector<32x256xf32> to vector<32x256xbf16>
    %cst_13 = arith.constant dense<0.000000e+00> : vector<32x256xf32>
    %25 = tpu.matmul %21, %24, %cst_13 {dimension_numbers = #tpu.dot_dimension_numbers<[1], [0], [0], [1], [0, 0, 1, 1], [], []>} : vector<32x32xbf16>, vector<32x256xbf16>, vector<32x256xf32> -> vector<32x256xf32>
    %c0_14 = arith.constant 0 : index
    %c0_15 = arith.constant 0 : index
    %26 = vector.load %arg8[%c0_14, %c0_15] : memref<32x1xf32, #tpu.memory_space<vmem>>, vector<32x1xf32>
    %27 = vector.broadcast %26 : vector<32x1xf32> to vector<32x256xf32>
    %28 = arith.addf %25, %27 : vector<32x256xf32>
    %c0_16 = arith.constant 0 : index
    %c0_17 = arith.constant 0 : index
    %29 = vector.load %arg9[%c0_16, %c0_17] : memref<3x32xbf16, #tpu.memory_space<vmem>>, vector<3x32xbf16>
    %cst_18 = arith.constant 0.000000e+00 : f32
    %30 = vector.broadcast %cst_18 : f32 to vector<32x256xf32>
    %31 = arith.maximumf %28, %30 : vector<32x256xf32>
    %32 = arith.truncf %31 : vector<32x256xf32> to vector<32x256xbf16>
    %cst_19 = arith.constant dense<0.000000e+00> : vector<3x256xf32>
    %33 = tpu.matmul %29, %32, %cst_19 {dimension_numbers = #tpu.dot_dimension_numbers<[1], [0], [0], [1], [0, 0, 1, 1], [], []>} : vector<3x32xbf16>, vector<32x256xbf16>, vector<3x256xf32> -> vector<3x256xf32>
    %c0_20 = arith.constant 0 : index
    %c0_21 = arith.constant 0 : index
    %34 = vector.load %arg10[%c0_20, %c0_21] : memref<3x1xf32, #tpu.memory_space<vmem>>, vector<3x1xf32>
    %35 = vector.broadcast %34 : vector<3x1xf32> to vector<3x256xf32>
    %36 = arith.addf %33, %35 : vector<3x256xf32>
    %c0_22 = arith.constant 0 : index
    %c0_23 = arith.constant 0 : index
    %c0_24 = arith.constant 0 : index
    %37 = vector.load %arg11[%c0_22, %c0_23, %c0_24] : memref<1x3x256xf32, #tpu.memory_space<vmem>>, vector<1x3x256xf32>
    %38 = vector.shape_cast %37 : vector<1x3x256xf32> to vector<3x256xf32>
    %39 = vector.shape_cast %36 : vector<3x256xf32> to vector<1x3x256xf32>
    tpu.vector_store %arg11[%c0_22, %c0_23, %c0_24], %39 {strides = array<i32>} : memref<1x3x256xf32, #tpu.memory_space<vmem>>, vector<1x3x256xf32>,
    return
  }
  func.func @transform_0(%arg0: i32, %arg1: i32) -> (i32, i32, i32) {
    %c0_i32 = arith.constant 0 : i32
    %c0_i32_0 = arith.constant 0 : i32
    return %arg1, %c0_i32, %arg0 : i32, i32, i32
  }
  func.func @transform_1(%arg0: i32, %arg1: i32) -> (i32, i32) {
    %c0_i32 = arith.constant 0 : i32
    %c0_i32_0 = arith.constant 0 : i32
    return %c0_i32, %arg0 : i32, i32
  }
  func.func @transform_2(%arg0: i32, %arg1: i32) -> (i32, i32) {
    %c0_i32 = arith.constant 0 : i32
    %c0_i32_0 = arith.constant 0 : i32
    %c0_i32_1 = arith.constant 0 : i32
    return %c0_i32, %c0_i32_0 : i32, i32
  }
  func.func @transform_3(%arg0: i32, %arg1: i32) -> (i32, i32) {
    %c0_i32 = arith.constant 0 : i32
    %c0_i32_0 = arith.constant 0 : i32
    %c0_i32_1 = arith.constant 0 : i32
    return %c0_i32, %c0_i32_0 : i32, i32
  }
  func.func @transform_4(%arg0: i32, %arg1: i32) -> (i32, i32) {
    %c0_i32 = arith.constant 0 : i32
    %c0_i32_0 = arith.constant 0 : i32
    %c0_i32_1 = arith.constant 0 : i32
    return %c0_i32, %c0_i32_0 : i32, i32
  }
  func.func @transform_5(%arg0: i32, %arg1: i32) -> (i32, i32) {
    %c0_i32 = arith.constant 0 : i32
    %c0_i32_0 = arith.constant 0 : i32
    %c0_i32_1 = arith.constant 0 : i32
    return %c0_i32, %c0_i32_0 : i32, i32
  }
  func.func @transform_6(%arg0: i32, %arg1: i32) -> (i32, i32) {
    %c0_i32 = arith.constant 0 : i32
    %c0_i32_0 = arith.constant 0 : i32
    %c0_i32_1 = arith.constant 0 : i32
    return %c0_i32, %c0_i32_0 : i32, i32
  }
  func.func @transform_7(%arg0: i32, %arg1: i32) -> (i32, i32) {
    %c0_i32 = arith.constant 0 : i32
    %c0_i32_0 = arith.constant 0 : i32
    %c0_i32_1 = arith.constant 0 : i32
    return %c0_i32, %c0_i32_0 : i32, i32
  }
  func.func @transform_8(%arg0: i32, %arg1: i32) -> (i32, i32) {
    %c0_i32 = arith.constant 0 : i32
    %c0_i32_0 = arith.constant 0 : i32
    %c0_i32_1 = arith.constant 0 : i32
    return %c0_i32, %c0_i32_0 : i32, i32
  }
  func.func @transform_9(%arg0: i32, %arg1: i32) -> (i32, i32, i32) {
    %c0_i32 = arith.constant 0 : i32
    %c0_i32_0 = arith.constant 0 : i32
    return %arg1, %c0_i32, %arg0 : i32, i32, i32
  }
}

</mosaic_0001>

<llo_original>
// kernel: a_call__.1
$region0: #{a_call__.1}
  #allocation0 [shape = 'u32[]', space=smem, size = 0x4, offset = 0x4, fixed_abs, tag = 'smem constant byte address 0x4 - core index']
  #allocation1 [shape = 'u32[144,128]{1,0:T(1,128)}', space=vmem, size = 0x12000, scoped, tag = 'internal scratch']
  %s0 = inlined_call_operand.vmem [shape: bf16[2,36,256], index: 0, kind: input, shape index: {}]
  %s1 = inlined_call_operand.vmem [shape: f32[2,256], index: 1, kind: input, shape index: {}]
  %s2 = inlined_call_operand.vmem [shape: bf16[32,36], index: 2, kind: input, shape index: {}]
  %s3 = inlined_call_operand.vmem [shape: f32[32,2], index: 3, kind: input, shape index: {}]
  %s4 = inlined_call_operand.vmem [shape: f32[32,1], index: 4, kind: input, shape index: {}]
  %s5 = inlined_call_operand.vmem [shape: bf16[32,32], index: 5, kind: input, shape index: {}]
  %s6 = inlined_call_operand.vmem [shape: f32[32,1], index: 6, kind: input, shape index: {}]
  %s7 = inlined_call_operand.vmem [shape: bf16[3,32], index: 7, kind: input, shape index: {}]
  %s8 = inlined_call_operand.vmem [shape: f32[3,1], index: 8, kind: input, shape index: {}]
  %s9 = inlined_call_operand.vmem [shape: f32[2,3,256], index: 9, kind: output, shape index: {}]
  %s10 = sld [smem:[#allocation0]]
  $region69: #{a_call__.1} parent=0
    _
  %s12 = ssub.s32 1, %s10
  %s13 = scalar_select 0, %s12, %s10
  loop: start=0, step=1, limit=4
  $region2: #{a_call__.1} parent=0 // loop_pre_header
    _
  $region3: #{a_call__.1} parent=0 // loop_header
    %s15 = sphi 0, %s19
    %p16 = scmp.ge.s32.totalorder %s15, 4
    %s22 = sphi 0, %s34
    %s23 = sphi 0, %s30
    %s24 = sphi 0, %s22
    %s25 = sphi 0, %s23
    %s26 = sphi 0, %s24
    %s27 = sphi 0, %s25
    %s39 = sphi 0, %s41
    %s42 = sphi 0, %s39
    %s43 = sphi 0, %s42
    %s59 = sphi 0, %s43
    %s65 = sphi 0, %s67
    %s68 = sphi 0, %s65
    %s69 = sphi 0, %s68
    %s85 = sphi 0, %s69
    %s89 = sphi 0, %s89
    %s91 = sphi 0, %s89
    %s92 = sphi 0, %s91
    %s106 = sphi 0, %s92
    %s110 = sphi 0, %s110
    %s112 = sphi 0, %s110
    %s113 = sphi 0, %s112
    %s127 = sphi 0, %s113
    %s131 = sphi 0, %s131
    %s133 = sphi 0, %s131
    %s134 = sphi 0, %s133
    %s148 = sphi 0, %s134
    %s152 = sphi 0, %s152
    %s154 = sphi 0, %s152
    %s155 = sphi 0, %s154
    %s169 = sphi 0, %s155
    %s173 = sphi 0, %s173
    %s175 = sphi 0, %s173
    %s176 = sphi 0, %s175
    %s190 = sphi 0, %s176
    %s194 = sphi 0, %s194
    %s196 = sphi 0, %s194
    %s197 = sphi 0, %s196
    %s211 = sphi 0, %s197
    %s215 = sphi 0, %s215
    %s217 = sphi 0, %s215
    %s218 = sphi 0, %s217
    %s232 = sphi 0, %s218
    %s240 = sphi 0, %s242
    %s243 = sphi 0, %s240
    %s244 = sphi 0, %s243
    %s260 = sphi 0, %s244
  $region4: #{a_call__.1} parent=0 // loop_header_branch
    %18 = sbr.rel (%p16) target = $region8
  $region5: #{a_call__.1} parent=0 // loop_body
    %s20 = ssub.s32 %s15, 1
    %s21 = ssub.s32 %s15, 2
    %s28 = sadd.s32 1, %s23
    %p29 = scmp.ge.s32.totalorder %s28, 2
    %s30 = scalar_select %p29, 0, %s28
    %s31 = sadd.s32 1, %s22
    %s32 = scalar_select %p29, %s31, %s22
    %p33 = scmp.ge.s32.totalorder %s32, 1
    %s34 = scalar_select %p33, 0, %s32
    %s35 = ssub.s32 %s23, %s30
    %s36 = ssub.s32 %s22, %s34
    %s37 = sor.u32 %s35, %s36
    %p38 = scmp.eq.s32.totalorder %s37, 0
    %s40 = sadd.s32 %s39, 1
    %s41 = scalar_select %p38, %s39, %s40
    %p44 = pneg %p38
    %p45 = scmp.eq.s32.totalorder %s15, 1
    %p46 = por %p44, %p45
    %p47 = scmp.ne.s32.totalorder %s39, %s42
    %p48 = scmp.eq.s32.totalorder %s15, 0
    %p49 = por %p47, %p48
    %p50 = scmp.ne.s32.totalorder %s39, %s42
    %p51 = scmp.eq.s32.totalorder %s20, 1
    %p52 = por %p50, %p51
    %p53 = scmp.ne.s32.totalorder %s42, %s43
    %p54 = scmp.eq.s32.totalorder %s20, 0
    %p55 = por %p53, %p54
    %p56 = scmp.ne.s32.totalorder %s42, %s43
    %p57 = scmp.eq.s32.totalorder %s21, 1
    %p58 = por %p56, %p57
    %p60 = scmp.ne.s32.totalorder %s43, %s59
    %p61 = scmp.eq.s32.totalorder %s21, 0
    %p62 = por %p60, %p61
    %s63 = ssub.s32 %s22, %s34
    %p64 = scmp.eq.s32.totalorder %s63, 0
    %s66 = sadd.s32 %s65, 1
    %s67 = scalar_select %p64, %s65, %s66
    %p70 = pneg %p64
    %p71 = scmp.eq.s32.totalorder %s15, 1
    %p72 = por %p70, %p71
    %p73 = scmp.ne.s32.totalorder %s65, %s68
    %p74 = scmp.eq.s32.totalorder %s15, 0
    %p75 = por %p73, %p74
    %p76 = scmp.ne.s32.totalorder %s65, %s68
    %p77 = scmp.eq.s32.totalorder %s20, 1
    %p78 = por %p76, %p77
    %p79 = scmp.ne.s32.totalorder %s68, %s69
    %p80 = scmp.eq.s32.totalorder %s20, 0
    %p81 = por %p79, %p80
    %p82 = scmp.ne.s32.totalorder %s68, %s69
    %p83 = scmp.eq.s32.totalorder %s21, 1
    %p84 = por %p82, %p83
    %p86 = scmp.ne.s32.totalorder %s69, %s85
    %p87 = scmp.eq.s32.totalorder %s21, 0
    %p88 = por %p86, %p87
    %s90 = sadd.s32 %s89, 1
    %p93 = scmp.eq.s32.totalorder %s15, 1
    %p94 = scmp.ne.s32.totalorder %s89, %s91
    %p95 = scmp.eq.s32.totalorder %s15, 0
    %p96 = por %p94, %p95
    %p97 = scmp.ne.s32.totalorder %s89, %s91
    %p98 = scmp.eq.s32.totalorder %s20, 1
    %p99 = por %p97, %p98
    %p100 = scmp.ne.s32.totalorder %s91, %s92
    %p101 = scmp.eq.s32.totalorder %s20, 0
    %p102 = por %p100, %p101
    %p103 = scmp.ne.s32.totalorder %s91, %s92
    %p104 = scmp.eq.s32.totalorder %s21, 1
    %p105 = por %p103, %p104
    %p107 = scmp.ne.s32.totalorder %s92, %s106
    %p108 = scmp.eq.s32.totalorder %s21, 0
    %p109 = por %p107, %p108
    %s111 = sadd.s32 %s110, 1
    %p114 = scmp.eq.s32.totalorder %s15, 1
    %p115 = scmp.ne.s32.totalorder %s110, %s112
    %p116 = scmp.eq.s32.totalorder %s15, 0
    %p117 = por %p115, %p116
    %p118 = scmp.ne.s32.totalorder %s110, %s112
    %p119 = scmp.eq.s32.totalorder %s20, 1
    %p120 = por %p118, %p119
    %p121 = scmp.ne.s32.totalorder %s112, %s113
    %p122 = scmp.eq.s32.totalorder %s20, 0
    %p123 = por %p121, %p122
    %p124 = scmp.ne.s32.totalorder %s112, %s113
    %p125 = scmp.eq.s32.totalorder %s21, 1
    %p126 = por %p124, %p125
    %p128 = scmp.ne.s32.totalorder %s113, %s127
    %p129 = scmp.eq.s32.totalorder %s21, 0
    %p130 = por %p128, %p129
    %s132 = sadd.s32 %s131, 1
    %p135 = scmp.eq.s32.totalorder %s15, 1
    %p136 = scmp.ne.s32.totalorder %s131, %s133
    %p137 = scmp.eq.s32.totalorder %s15, 0
    %p138 = por %p136, %p137
    %p139 = scmp.ne.s32.totalorder %s131, %s133
    %p140 = scmp.eq.s32.totalorder %s20, 1
    %p141 = por %p139, %p140
    %p142 = scmp.ne.s32.totalorder %s133, %s134
    %p143 = scmp.eq.s32.totalorder %s20, 0
    %p144 = por %p142, %p143
    %p145 = scmp.ne.s32.totalorder %s133, %s134
    %p146 = scmp.eq.s32.totalorder %s21, 1
    %p147 = por %p145, %p146
    %p149 = scmp.ne.s32.totalorder %s134, %s148
    %p150 = scmp.eq.s32.totalorder %s21, 0
    %p151 = por %p149, %p150
    %s153 = sadd.s32 %s152, 1
    %p156 = scmp.eq.s32.totalorder %s15, 1
    %p157 = scmp.ne.s32.totalorder %s152, %s154
    %p158 = scmp.eq.s32.totalorder %s15, 0
    %p159 = por %p157, %p158
    %p160 = scmp.ne.s32.totalorder %s152, %s154
    %p161 = scmp.eq.s32.totalorder %s20, 1
    %p162 = por %p160, %p161
    %p163 = scmp.ne.s32.totalorder %s154, %s155
    %p164 = scmp.eq.s32.totalorder %s20, 0
    %p165 = por %p163, %p164
    %p166 = scmp.ne.s32.totalorder %s154, %s155
    %p167 = scmp.eq.s32.totalorder %s21, 1
    %p168 = por %p166, %p167
    %p170 = scmp.ne.s32.totalorder %s155, %s169
    %p171 = scmp.eq.s32.totalorder %s21, 0
    %p172 = por %p170, %p171
    %s174 = sadd.s32 %s173, 1
    %p177 = scmp.eq.s32.totalorder %s15, 1
    %p178 = scmp.ne.s32.totalorder %s173, %s175
    %p179 = scmp.eq.s32.totalorder %s15, 0
    %p180 = por %p178, %p179
    %p181 = scmp.ne.s32.totalorder %s173, %s175
    %p182 = scmp.eq.s32.totalorder %s20, 1
    %p183 = por %p181, %p182
    %p184 = scmp.ne.s32.totalorder %s175, %s176
    %p185 = scmp.eq.s32.totalorder %s20, 0
    %p186 = por %p184, %p185
    %p187 = scmp.ne.s32.totalorder %s175, %s176
    %p188 = scmp.eq.s32.totalorder %s21, 1
    %p189 = por %p187, %p188
    %p191 = scmp.ne.s32.totalorder %s176, %s190
    %p192 = scmp.eq.s32.totalorder %s21, 0
    %p193 = por %p191, %p192
    %s195 = sadd.s32 %s194, 1
    %p198 = scmp.eq.s32.totalorder %s15, 1
    %p199 = scmp.ne.s32.totalorder %s194, %s196
    %p200 = scmp.eq.s32.totalorder %s15, 0
    %p201 = por %p199, %p200
    %p202 = scmp.ne.s32.totalorder %s194, %s196
    %p203 = scmp.eq.s32.totalorder %s20, 1
    %p204 = por %p202, %p203
    %p205 = scmp.ne.s32.totalorder %s196, %s197
    %p206 = scmp.eq.s32.totalorder %s20, 0
    %p207 = por %p205, %p206
    %p208 = scmp.ne.s32.totalorder %s196, %s197
    %p209 = scmp.eq.s32.totalorder %s21, 1
    %p210 = por %p208, %p209
    %p212 = scmp.ne.s32.totalorder %s197, %s211
    %p213 = scmp.eq.s32.totalorder %s21, 0
    %p214 = por %p212, %p213
    %s216 = sadd.s32 %s215, 1
    %p219 = scmp.eq.s32.totalorder %s15, 1
    %p220 = scmp.ne.s32.totalorder %s215, %s217
    %p221 = scmp.eq.s32.totalorder %s15, 0
    %p222 = por %p220, %p221
    %p223 = scmp.ne.s32.totalorder %s215, %s217
    %p224 = scmp.eq.s32.totalorder %s20, 1
    %p225 = por %p223, %p224
    %p226 = scmp.ne.s32.totalorder %s217, %s218
    %p227 = scmp.eq.s32.totalorder %s20, 0
    %p228 = por %p226, %p227
    %p229 = scmp.ne.s32.totalorder %s217, %s218
    %p230 = scmp.eq.s32.totalorder %s21, 1
    %p231 = por %p229, %p230
    %p233 = scmp.ne.s32.totalorder %s218, %s232
    %p234 = scmp.eq.s32.totalorder %s21, 0
    %p235 = por %p233, %p234
    %s236 = ssub.s32 %s23, %s30
    %s237 = ssub.s32 %s22, %s34
    %s238 = sor.u32 %s236, %s237
    %p239 = scmp.eq.s32.totalorder %s238, 0
    %s241 = sadd.s32 %s240, 1
    %s242 = scalar_select %p239, %s240, %s241
    %p245 = pneg %p239
    %p246 = scmp.eq.s32.totalorder %s15, 1
    %p247 = por %p245, %p246
    %p248 = scmp.ne.s32.totalorder %s240, %s243
    %p249 = scmp.eq.s32.totalorder %s15, 0
    %p250 = por %p248, %p249
    %p251 = scmp.ne.s32.totalorder %s240, %s243
    %p252 = scmp.eq.s32.totalorder %s20, 1
    %p253 = por %p251, %p252
    %p254 = scmp.ne.s32.totalorder %s243, %s244
    %p255 = scmp.eq.s32.totalorder %s20, 0
    %p256 = por %p254, %p255
    %p257 = scmp.ne.s32.totalorder %s243, %s244
    %p258 = scmp.eq.s32.totalorder %s21, 1
    %p259 = por %p257, %p258
    %p261 = scmp.ne.s32.totalorder %s244, %s260
    %p262 = scmp.eq.s32.totalorder %s21, 0
    %p263 = por %p261, %p262
    %p264 = scmp.le.s32.totalorder 1, %s15
    %p265 = scmp.lt.s32.totalorder %s15, 3
    %p266 = pnand %p264, %p265
    %p267 = pneg %p266
    // Predicated region
    $region9: #{a_call__.1} parent=5 // pred_check
      _
    $region10: #{a_call__.1} parent=5 // pred_check_branch
      %269 = sbr.rel (%p266) target = $region12
    $region11: #{a_call__.1} parent=5 // pred_region
      %s270 = ssub.s32 %s15, 1
      // Predicated region
      $region13: #{a_call__.1} parent=11 // pred_check
        %p271 = pneg %p81
      $region14: #{a_call__.1} parent=11 // pred_check_branch
        %273 = sbr.rel (%p271) target = $region16
      $region15: #{a_call__.1} parent=11 // pred_region
        %s274 = smul.u32 2, %s24
        %p275 = scmp.lt.s32.totalorder %s274, 1
        %s276 = scalar_select %p275, %s274, 1
        %s277 = smul.addr %s276, 2
        %s278 = scalar_lea.vmem %s1, %s277
        %s279 = smul.u32 2, %s24
      $region16: #{a_call__.1} parent=11 // pred_fallthru
        _
      // Predicated region
      $region17: #{a_call__.1} parent=11 // pred_check
        %p280 = pneg %p102
      $region18: #{a_call__.1} parent=11 // pred_check_branch
        %282 = sbr.rel (%p280) target = $region20
      $region19: #{a_call__.1} parent=11 // pred_region
        _
      $region20: #{a_call__.1} parent=11 // pred_fallthru
        _
      // Predicated region
      $region21: #{a_call__.1} parent=11 // pred_check
        %p283 = pneg %p123
      $region22: #{a_call__.1} parent=11 // pred_check_branch
        %285 = sbr.rel (%p283) target = $region24
      $region23: #{a_call__.1} parent=11 // pred_region
        _
      $region24: #{a_call__.1} parent=11 // pred_fallthru
        _
      // Predicated region
      $region25: #{a_call__.1} parent=11 // pred_check
        %p286 = pneg %p144
      $region26: #{a_call__.1} parent=11 // pred_check_branch
        %288 = sbr.rel (%p286) target = $region28
      $region27: #{a_call__.1} parent=11 // pred_region
        _
      $region28: #{a_call__.1} parent=11 // pred_fallthru
        _
      // Predicated region
      $region29: #{a_call__.1} parent=11 // pred_check
        %p289 = pneg %p165
      $region30: #{a_call__.1} parent=11 // pred_check_branch
        %291 = sbr.rel (%p289) target = $region32
      $region31: #{a_call__.1} parent=11 // pred_region
        _
      $region32: #{a_call__.1} parent=11 // pred_fallthru
        _
      // Predicated region
      $region33: #{a_call__.1} parent=11 // pred_check
        %p292 = pneg %p186
      $region34: #{a_call__.1} parent=11 // pred_check_branch
        %294 = sbr.rel (%p292) target = $region36
      $region35: #{a_call__.1} parent=11 // pred_region
        _
      $region36: #{a_call__.1} parent=11 // pred_fallthru
        _
      // Predicated region
      $region37: #{a_call__.1} parent=11 // pred_check
        %p295 = pneg %p207
      $region38: #{a_call__.1} parent=11 // pred_check_branch
        %297 = sbr.rel (%p295) target = $region40
      $region39: #{a_call__.1} parent=11 // pred_region
        _
      $region40: #{a_call__.1} parent=11 // pred_fallthru
        _
      // Predicated region
      $region41: #{a_call__.1} parent=11 // pred_check
        %p298 = pneg %p228
      $region42: #{a_call__.1} parent=11 // pred_check_branch
        %300 = sbr.rel (%p298) target = $region44
      $region43: #{a_call__.1} parent=11 // pred_region
        _
      $region44: #{a_call__.1} parent=11 // pred_fallthru
        _
    $region12: #{a_call__.1} parent=5 // pred_fallthru
      _
    %p301 = scmp.lt.s32.totalorder %s15, 2
    // Predicated region
    $region45: #{a_call__.1} parent=5 // pred_check
      %p302 = pneg %p301
    $region46: #{a_call__.1} parent=5 // pred_check_branch
      %304 = sbr.rel (%p302) target = $region48
    $region47: #{a_call__.1} parent=5 // pred_region
      // Predicated region
      $region49: #{a_call__.1} parent=47 // pred_check
        %p305 = pneg %p49
      $region50: #{a_call__.1} parent=47 // pred_check_branch
        %307 = sbr.rel (%p305) target = $region52
      $region51: #{a_call__.1} parent=47 // pred_region
        %s308 = smul.u32 2, %s22
        %p309 = scmp.lt.s32.totalorder %s23, 1
        %s310 = scalar_select %p309, %s23, 1
        %p311 = scmp.lt.s32.totalorder %s308, 1
        %s312 = scalar_select %p311, %s308, 1
        %s313 = smul.addr %s310, 10
        %s314 = sadd.s32 %s312, %s313
        %s315 = smul.addr %s314, 4
        %s316 = scalar_lea.vmem %s0, %s315
        %s317 = smul.u32 2, %s22
      $region52: #{a_call__.1} parent=47 // pred_fallthru
        _
    $region48: #{a_call__.1} parent=5 // pred_fallthru
      _
    %p318 = scmp.le.s32.totalorder 1, %s15
    %p319 = scmp.lt.s32.totalorder %s15, 3
    %p320 = pnand %p318, %p319
    %p321 = pneg %p320
    // Predicated region
    $region53: #{a_call__.1} parent=5 // pred_check
      _
    $region54: #{a_call__.1} parent=5 // pred_check_branch
      %323 = sbr.rel (%p320) target = $region56
    $region55: #{a_call__.1} parent=5 // pred_region
      %s324 = ssub.s32 %s15, 1
      %s325 = smul.u32 2, %s24
      %p326 = scmp.lt.s32.totalorder %s25, 1
      %s327 = scalar_select %p326, %s25, 1
      %p328 = scmp.lt.s32.totalorder %s325, 1
      %s329 = scalar_select %p328, %s325, 1
      %s330 = smul.addr %s327, 10
      %s331 = sadd.s32 %s329, %s330
      %s332 = smul.addr %s331, 4
      %s333 = scalar_lea.vmem %s0, %s332
      %p334 = pneg %p55
      %p335 = pneg %p52
      %s336 = smul.u32 2, %s24
      %p337 = scmp.lt.s32.totalorder %s336, 1
      %s338 = scalar_select %p337, %s336, 1
      %s339 = smul.addr %s338, 2
      %s340 = scalar_lea.vmem %s1, %s339
      %p341 = pneg %p81
      %p342 = pneg %p78
      %p343 = pneg %p102
      %p344 = pneg %p99
      %p345 = pneg %p123
      %p346 = pneg %p120
      %p347 = pneg %p144
      %p348 = pneg %p141
      %p349 = pneg %p165
      %p350 = pneg %p162
      %p351 = pneg %p186
      %p352 = pneg %p183
      %p353 = pneg %p207
      %p354 = pneg %p204
      %p355 = pneg %p228
      %p356 = pneg %p225
      %p357 = pneg %p256
      %p358 = pneg %p253
      %s359 = smul.u32 2, %s24
      %p360 = scmp.lt.s32.totalorder %s25, 1
      %s361 = scalar_select %p360, %s25, 1
      %p362 = scmp.lt.s32.totalorder %s359, 1
      %s363 = scalar_select %p362, %s359, 1
      %s364 = smul.addr %s361, 2
      %s365 = sadd.s32 %s363, %s364
      %s366 = smul.addr %s365, 4
      %s367 = scalar_lea.vmem %s9, %s366
      %s368 = smul.u32 2, %s24
      %p369 = scmp.lt.s32.totalorder %s25, 1
      %s370 = scalar_select %p369, %s25, 1
      %p371 = scmp.lt.s32.totalorder %s368, 1
      %s372 = scalar_select %p371, %s368, 1
      %s373 = smul.addr %s370, 10
      %s374 = sadd.s32 %s372, %s373
      %s375 = smul.addr %s374, 4
      %s376 = scalar_lea.vmem %s0, %s375
      %s377 = smul.u32 2, %s24
      %s378 = smul.u32 2, %s24
      %p379 = scmp.lt.s32.totalorder %s378, 1
      %s380 = scalar_select %p379, %s378, 1
      %s381 = smul.addr %s380, 2
      %s382 = scalar_lea.vmem %s1, %s381
      %s383 = smul.u32 2, %s24
      %s384 = smul.u32 2, %s24
      %p385 = scmp.lt.s32.totalorder %s25, 1
      %s386 = scalar_select %p385, %s25, 1
      %p387 = scmp.lt.s32.totalorder %s384, 1
      %s388 = scalar_select %p387, %s384, 1
      %s389 = smul.addr %s386, 2
      %s390 = sadd.s32 %s388, %s389
      %s391 = smul.addr %s390, 4
      %s392 = scalar_lea.vmem %s9, %s391
      %s393 = smul.u32 2, %s24
      %v395 = vld [vmem:[%s2] sm:$0xf]
      %v396 = vld [vmem:[%s2 + $0x4] sm:$0xf]
      %v397 = vld [vmem:[%s2 + $0x8] sm:$0xf]
      %v398 = vld [vmem:[%s2 + $0xc] sm:$0xf]
      %v399 = vld [vmem:[%s376] sm:$0xff]
      %v400 = vld [vmem:[%s376 + $0x8] sm:$0xff]
      %v401 = vld [vmem:[%s376 + $0x10] sm:$0xff]
      %v402 = vld [vmem:[%s376 + $0x18] sm:$0xff]
      %v403 = vld [vmem:[%s376 + $0x20] sm:$0x33]
      %v404 = vld [vmem:[%s3] sm:$0xff]
      %v405 = vld [vmem:[%s3 + $0x8] sm:$0xff]
      %v406 = vld [vmem:[%s3 + $0x10] sm:$0xff]
      %v407 = vld [vmem:[%s3 + $0x18] sm:$0xff]
      %v408 = vld [vmem:[%s382] sm:$0xf]
      %410 = vset.pattern.permute.xlu0 0
      %411 = vperm.xlu0 %410, %v404
      %v412 = vpop.permute.xlu0 %411
      %415 = vset.pattern.permute.xlu0 0
      %416 = vperm.xlu0 %415, %v405
      %v417 = vpop.permute.xlu0 %416
      %420 = vset.pattern.permute.xlu0 0
      %421 = vperm.xlu0 %420, %v406
      %v422 = vpop.permute.xlu0 %421
      %425 = vset.pattern.permute.xlu0 0
      %426 = vperm.xlu0 %425, %v407
      %v427 = vpop.permute.xlu0 %426
      %v430 = vlaneseq
      %v431 = vshrl.u32 %v430, 7
      %v432 = vsub.s32 0, %v431
      %v433 = vrot.slane %v408, %v432
      %v434 = vlaneseq
      %v435 = vshrl.u32 %v434, 7
      %v436 = vsub.s32 2, %v435
      %v437 = vrot.slane %v408, %v436
      %v440 = vlaneseq
      %v441 = vshrl.u32 %v440, 7
      %v442 = vsub.s32 0, %v441
      %v443 = vrot.slane %v433, %v442
      %v444 = vlaneseq
      %v445 = vshrl.u32 %v444, 7
      %v446 = vsub.s32 0, %v445
      %v447 = vrot.slane %v437, %v446
      %v448 = vmul.f32 %v412, %v443
      %v449 = vmul.f32 %v412, %v447
      %v450 = vmul.f32 %v417, %v443
      %v451 = vmul.f32 %v417, %v447
      %v452 = vmul.f32 %v422, %v443
      %v453 = vmul.f32 %v422, %v447
      %v454 = vmul.f32 %v427, %v443
      %v455 = vmul.f32 %v427, %v447
      %v460 = vunpack.c.l.b16 %v395
      %v461 = vunpack.c.l.b16 %v396
      %v462 = vunpack.c.l.b16 %v397
      %v463 = vunpack.c.l.b16 %v398
      %v464 = vpack.c.b16 %v461, %v460
      %v465 = vpack.c.b16 %v463, %v462
      %v471 = vunpack.c.l.b16 %v399
      %v472 = vunpack.c.h.b16 %v399
      %v473 = vunpack.c.l.b16 %v400
      %v474 = vunpack.c.h.b16 %v400
      %v475 = vunpack.c.l.b16 %v401
      %v476 = vunpack.c.h.b16 %v401
      %v477 = vunpack.c.l.b16 %v402
      %v478 = vunpack.c.h.b16 %v402
      %v479 = vunpack.c.l.b16 %v403
      %v480 = vunpack.c.h.b16 %v403
      %v481 = vpack.c.b16 %v473, %v471
      %v482 = vpack.c.b16 %v474, %v472
      %v483 = vpack.c.b16 %v477, %v475
      %v484 = vpack.c.b16 %v478, %v476
      %v485 = vpack.c.b16 %v479, %v479
      %v486 = vpack.c.b16 %v480, %v480
      %vm491 = vcmask 293888
      %v493 = vsel %vm491, %v464, 0
      %v496 = vsel %vm491, %v465, 0
      %vm498 = vcmask 1041408
      %v500 = vsel %vm498, %v485, 0
      %v503 = vsel %vm498, %v486, 0
      %505 = vmatprep.subr.bf16.mxu0 %v482
      %506 = vmatpush1.bf16.msra.mxu0 %v481
      %507 = vmatprep.subr.bf16.mxu0 %v484
      %508 = vmatpush1.bf16.msra.mxu0 %v483
      %509 = vmatprep.subr.bf16.mxu0 %v503
      %510 = vmatpush1.bf16.msra.mxu0 %v500
      %511 = vmatprep.subr.bf16.mxu0 0
      %512 = vmatpush1.bf16.msra.mxu0 0
      %513 = vmatprep.subr.bf16.mxu0 0
      %514 = vmatpush1.bf16.msra.mxu0 0
      %515 = vmatprep.subr.bf16.mxu0 0
      %516 = vmatpush1.bf16.msra.mxu0 0
      %517 = vmatprep.subr.bf16.mxu0 0
      %518 = vmatpush1.bf16.msra.mxu0 0
      %519 = vmatprep.subr.bf16.mxu0 0
      %520 = vmatpush1.bf16.msra.mxu0 0
      %521 = vmatprep.subr.bf16.mxu0 0
      %522 = vmatpush1.bf16.msra.mxu0 0
      %523 = vmatprep.subr.bf16.mxu0 0
      %524 = vmatpush1.bf16.msra.mxu0 0
      %525 = vmatprep.subr.bf16.mxu0 0
      %526 = vmatpush1.bf16.msra.mxu0 0
      %527 = vmatprep.subr.bf16.mxu0 0
      %528 = vmatpush1.bf16.msra.mxu0 0
      %529 = vmatprep.subr.bf16.mxu0 0
      %530 = vmatpush1.bf16.msra.mxu0 0
      %531 = vmatprep.subr.bf16.mxu0 0
      %532 = vmatpush1.bf16.msra.mxu0 0
      %533 = vmatprep.subr.bf16.mxu0 0
      %534 = vmatpush1.bf16.msra.mxu0 0
      %535 = vmatprep.subr.bf16.mxu0 0
      %536 = vmatpush1.bf16.msra.mxu0 0
      %537 = vmatprep.mubr.bf16.mxu0 0
      %538 = vmatmul.mubr.bf16.gmra.mrb[0].mxu0 %v493
      %v539 = vpop.f32.mrb[0].mxu0
      %v540 = vadd.f32 %v448, %v539
      %v541 = vpop.f32.mrb[0].mxu0
      %v542 = vadd.f32 %v449, %v541
      %v543 = vpop.f32.mrb[0].mxu0
      %v544 = vadd.f32 %v450, %v543
      %v545 = vpop.f32.mrb[0].mxu0
      %v546 = vadd.f32 %v451, %v545
      %547 = vmatprep.mubr.bf16.mxu0 0
      %548 = vmatmul.mubr.bf16.gmra.mrb[0].mxu0 %v496
      %v549 = vpop.f32.mrb[0].mxu0
      %v550 = vadd.f32 %v452, %v549
      %v551 = vpop.f32.mrb[0].mxu0
      %v552 = vadd.f32 %v453, %v551
      %v553 = vpop.f32.mrb[0].mxu0
      %v554 = vadd.f32 %v454, %v553
      %v555 = vpop.f32.mrb[0].mxu0
      %v556 = vadd.f32 %v455, %v555
      %557 = vdwg.mxu0
      %558 = vset.pattern.permute.xlu0 1
      %559 = vperm.xlu0 %558, %v404
      %v560 = vpop.permute.xlu0 %559
      %562 = vset.pattern.permute.xlu0 1
      %563 = vperm.xlu0 %562, %v405
      %v564 = vpop.permute.xlu0 %563
      %566 = vset.pattern.permute.xlu0 1
      %567 = vperm.xlu0 %566, %v406
      %v568 = vpop.permute.xlu0 %567
      %570 = vset.pattern.permute.xlu0 1
      %571 = vperm.xlu0 %570, %v407
      %v572 = vpop.permute.xlu0 %571
      %v574 = vlaneseq
      %v575 = vshrl.u32 %v574, 7
      %v576 = vsub.s32 1, %v575
      %v577 = vrot.slane %v408, %v576
      %v578 = vlaneseq
      %v579 = vshrl.u32 %v578, 7
      %v580 = vsub.s32 3, %v579
      %v581 = vrot.slane %v408, %v580
      %v584 = vlaneseq
      %v585 = vshrl.u32 %v584, 7
      %v586 = vsub.s32 1, %v585
      %v587 = vrot.slane %v577, %v586
      %v588 = vlaneseq
      %v589 = vshrl.u32 %v588, 7
      %v590 = vsub.s32 1, %v589
      %v591 = vrot.slane %v581, %v590
      %v592 = vmul.f32 %v560, %v587
      %v593 = vmul.f32 %v560, %v591
      %v594 = vmul.f32 %v564, %v587
      %v595 = vmul.f32 %v564, %v591
      %v596 = vmul.f32 %v568, %v587
      %v597 = vmul.f32 %v568, %v591
      %v598 = vmul.f32 %v572, %v587
      %v599 = vmul.f32 %v572, %v591
      %v600 = vadd.f32 %v540, %v592
      %v601 = vadd.f32 %v542, %v593
      %v602 = vadd.f32 %v544, %v594
      %v603 = vadd.f32 %v546, %v595
      %v604 = vadd.f32 %v550, %v596
      %v605 = vadd.f32 %v552, %v597
      %v606 = vadd.f32 %v554, %v598
      %v607 = vadd.f32 %v556, %v599
      %v608 = vld [vmem:[%s4] sm:$0xff]
      %v609 = vld [vmem:[%s4 + $0x8] sm:$0xff]
      %v610 = vld [vmem:[%s4 + $0x10] sm:$0xff]
      %v611 = vld [vmem:[%s4 + $0x18] sm:$0xff]
      %613 = vset.pattern.permute.xlu0 0
      %614 = vperm.xlu0 %613, %v608
      %v615 = vpop.permute.xlu0 %614
      %618 = vset.pattern.permute.xlu0 0
      %619 = vperm.xlu0 %618, %v609
      %v620 = vpop.permute.xlu0 %619
      %623 = vset.pattern.permute.xlu0 0
      %624 = vperm.xlu0 %623, %v610
      %v625 = vpop.permute.xlu0 %624
      %628 = vset.pattern.permute.xlu0 0
      %629 = vperm.xlu0 %628, %v611
      %v630 = vpop.permute.xlu0 %629
      %v632 = vadd.f32 %v600, %v615
      %v633 = vadd.f32 %v601, %v615
      %v634 = vadd.f32 %v602, %v620
      %v635 = vadd.f32 %v603, %v620
      %v636 = vadd.f32 %v604, %v625
      %v637 = vadd.f32 %v605, %v625
      %v638 = vadd.f32 %v606, %v630
      %v639 = vadd.f32 %v607, %v630
      %v640 = vld [vmem:[%s5] sm:$0xf]
      %v641 = vld [vmem:[%s5 + $0x4] sm:$0xf]
      %v642 = vld [vmem:[%s5 + $0x8] sm:$0xf]
      %v643 = vld [vmem:[%s5 + $0xc] sm:$0xf]
      %v644 = vmax.f32 %v632, 0.0
      %v645 = vmax.f32 %v633, 0.0
      %v646 = vmax.f32 %v634, 0.0
      %v647 = vmax.f32 %v635, 0.0
      %v648 = vmax.f32 %v636, 0.0
      %v649 = vmax.f32 %v637, 0.0
      %v650 = vmax.f32 %v638, 0.0
      %v651 = vmax.f32 %v639, 0.0
      %v652 = vpack.c.bf16 %v646, %v644
      %v653 = vpack.c.bf16 %v647, %v645
      %v654 = vpack.c.bf16 %v650, %v648
      %v655 = vpack.c.bf16 %v651, %v649
      %v656 = vld [vmem:[%s6] sm:$0xff]
      %v657 = vld [vmem:[%s6 + $0x8] sm:$0xff]
      %v658 = vld [vmem:[%s6 + $0x10] sm:$0xff]
      %v659 = vld [vmem:[%s6 + $0x18] sm:$0xff]
      %661 = vset.pattern.permute.xlu0 0
      %662 = vperm.xlu0 %661, %v656
      %v663 = vpop.permute.xlu0 %662
      %666 = vset.pattern.permute.xlu0 0
      %667 = vperm.xlu0 %666, %v657
      %v668 = vpop.permute.xlu0 %667
      %671 = vset.pattern.permute.xlu0 0
      %672 = vperm.xlu0 %671, %v658
      %v673 = vpop.permute.xlu0 %672
      %676 = vset.pattern.permute.xlu0 0
      %677 = vperm.xlu0 %676, %v659
      %v678 = vpop.permute.xlu0 %677
      %v684 = vunpack.c.l.b16 %v640
      %v685 = vunpack.c.l.b16 %v641
      %v686 = vunpack.c.l.b16 %v642
      %v687 = vunpack.c.l.b16 %v643
      %v688 = vpack.c.b16 %v685, %v684
      %v689 = vpack.c.b16 %v687, %v686
      %vm690 = vcmask 261120
      %v692 = vsel %vm690, %v688, 0
      %v695 = vsel %vm690, %v689, 0
      %697 = vmatprep.subr.bf16.mxu0 %v653
      %698 = vmatpush1.bf16.msra.mxu0 %v652
      %699 = vmatprep.subr.bf16.mxu0 %v655
      %700 = vmatpush1.bf16.msra.mxu0 %v654
      %701 = vmatprep.subr.bf16.mxu0 0
      %702 = vmatpush1.bf16.msra.mxu0 0
      %703 = vmatprep.subr.bf16.mxu0 0
      %704 = vmatpush1.bf16.msra.mxu0 0
      %705 = vmatprep.subr.bf16.mxu0 0
      %706 = vmatpush1.bf16.msra.mxu0 0
      %707 = vmatprep.subr.bf16.mxu0 0
      %708 = vmatpush1.bf16.msra.mxu0 0
      %709 = vmatprep.subr.bf16.mxu0 0
      %710 = vmatpush1.bf16.msra.mxu0 0
      %711 = vmatprep.subr.bf16.mxu0 0
      %712 = vmatpush1.bf16.msra.mxu0 0
      %713 = vmatprep.subr.bf16.mxu0 0
      %714 = vmatpush1.bf16.msra.mxu0 0
      %715 = vmatprep.subr.bf16.mxu0 0
      %716 = vmatpush1.bf16.msra.mxu0 0
      %717 = vmatprep.subr.bf16.mxu0 0
      %718 = vmatpush1.bf16.msra.mxu0 0
      %719 = vmatprep.subr.bf16.mxu0 0
      %720 = vmatpush1.bf16.msra.mxu0 0
      %721 = vmatprep.subr.bf16.mxu0 0
      %722 = vmatpush1.bf16.msra.mxu0 0
      %723 = vmatprep.subr.bf16.mxu0 0
      %724 = vmatpush1.bf16.msra.mxu0 0
      %725 = vmatprep.subr.bf16.mxu0 0
      %726 = vmatpush1.bf16.msra.mxu0 0
      %727 = vmatprep.subr.bf16.mxu0 0
      %728 = vmatpush1.bf16.msra.mxu0 0
      %729 = vmatprep.mubr.bf16.mxu0 0
      %730 = vmatmul.mubr.bf16.gmra.mrb[0].mxu0 %v692
      %v731 = vpop.f32.mrb[0].mxu0
      %v732 = vadd.f32 %v663, %v731
      %v733 = vpop.f32.mrb[0].mxu0
      %v734 = vadd.f32 %v663, %v733
      %v735 = vpop.f32.mrb[0].mxu0
      %v736 = vadd.f32 %v668, %v735
      %v737 = vpop.f32.mrb[0].mxu0
      %v738 = vadd.f32 %v668, %v737
      %739 = vmatprep.mubr.bf16.mxu0 0
      %740 = vmatmul.mubr.bf16.gmra.mrb[0].mxu0 %v695
      %v741 = vpop.f32.mrb[0].mxu0
      %v742 = vadd.f32 %v673, %v741
      %v743 = vpop.f32.mrb[0].mxu0
      %v744 = vadd.f32 %v673, %v743
      %v745 = vpop.f32.mrb[0].mxu0
      %v746 = vadd.f32 %v678, %v745
      %v747 = vpop.f32.mrb[0].mxu0
      %v748 = vadd.f32 %v678, %v747
      %749 = vdwg.mxu0
      %v750 = vld [vmem:[%s7] sm:$0x3]
      %v751 = vmax.f32 %v732, 0.0
      %v752 = vmax.f32 %v734, 0.0
      %v753 = vmax.f32 %v736, 0.0
      %v754 = vmax.f32 %v738, 0.0
      %v755 = vmax.f32 %v742, 0.0
      %v756 = vmax.f32 %v744, 0.0
      %v757 = vmax.f32 %v746, 0.0
      %v758 = vmax.f32 %v748, 0.0
      %v759 = vpack.c.bf16 %v753, %v751
      %v760 = vpack.c.bf16 %v754, %v752
      %v761 = vpack.c.bf16 %v757, %v755
      %v762 = vpack.c.bf16 %v758, %v756
      %v763 = vld [vmem:[%s8] sm:$0x7]
      %765 = vset.pattern.permute.xlu0 0
      %766 = vperm.xlu0 %765, %v763
      %v767 = vpop.permute.xlu0 %766
      %v770 = vsel %vm690, %v750, 0
      %772 = vmatprep.subr.bf16.mxu0 %v760
      %773 = vmatpush1.bf16.msra.mxu0 %v759
      %774 = vmatprep.subr.bf16.mxu0 %v762
      %775 = vmatpush1.bf16.msra.mxu0 %v761
      %776 = vmatprep.subr.bf16.mxu0 0
      %777 = vmatpush1.bf16.msra.mxu0 0
      %778 = vmatprep.subr.bf16.mxu0 0
      %779 = vmatpush1.bf16.msra.mxu0 0
      %780 = vmatprep.subr.bf16.mxu0 0
      %781 = vmatpush1.bf16.msra.mxu0 0
      %782 = vmatprep.subr.bf16.mxu0 0
      %783 = vmatpush1.bf16.msra.mxu0 0
      %784 = vmatprep.subr.bf16.mxu0 0
      %785 = vmatpush1.bf16.msra.mxu0 0
      %786 = vmatprep.subr.bf16.mxu0 0
      %787 = vmatpush1.bf16.msra.mxu0 0
      %788 = vmatprep.subr.bf16.mxu0 0
      %789 = vmatpush1.bf16.msra.mxu0 0
      %790 = vmatprep.subr.bf16.mxu0 0
      %791 = vmatpush1.bf16.msra.mxu0 0
      %792 = vmatprep.subr.bf16.mxu0 0
      %793 = vmatpush1.bf16.msra.mxu0 0
      %794 = vmatprep.subr.bf16.mxu0 0
      %795 = vmatpush1.bf16.msra.mxu0 0
      %796 = vmatprep.subr.bf16.mxu0 0
      %797 = vmatpush1.bf16.msra.mxu0 0
      %798 = vmatprep.subr.bf16.mxu0 0
      %799 = vmatpush1.bf16.msra.mxu0 0
      %800 = vmatprep.subr.bf16.mxu0 0
      %801 = vmatpush1.bf16.msra.mxu0 0
      %802 = vmatprep.subr.bf16.mxu0 0
      %803 = vmatpush1.bf16.msra.mxu0 0
      %804 = vmatprep.mubr.bf16.mxu0 0
      %805 = vmatmul.mubr.bf16.gmra.mrb[0].mxu0 %v770
      %v806 = vpop.f32.mrb[0].mxu0
      %v807 = vadd.f32 %v767, %v806
      %v808 = vpop.f32.mrb[0].mxu0
      %v809 = vadd.f32 %v767, %v808
      %v810 = vpop.f32.mrb[0].mxu0
      %v811 = vpop.f32.mrb[0].mxu0
      %812 = vdwg.mxu0
      %v815 = vcombine.low %v807, %v809
      %817 = vst [vmem:[%s392] sm:$0x77] %v815
      %s818 = smul.u32 2, %s24
      %p819 = scmp.lt.s32.totalorder %s25, 1
      %s820 = scalar_select %p819, %s25, 1
      %p821 = scmp.lt.s32.totalorder %s818, 1
      %s822 = scalar_select %p821, %s818, 1
      %s823 = smul.addr %s820, 2
      %s824 = sadd.s32 %s822, %s823
      %s825 = smul.addr %s824, 4
      %s826 = scalar_lea.vmem %s9, %s825
      // Predicated region
      $region57: #{a_call__.1} parent=55 // pred_check
        %p827 = pneg %p253
      $region58: #{a_call__.1} parent=55 // pred_check_branch
        %829 = sbr.rel (%p827) target = $region60
      $region59: #{a_call__.1} parent=55 // pred_region
        %s830 = smul.u32 2, %s24
      $region60: #{a_call__.1} parent=55 // pred_fallthru
        _
    $region56: #{a_call__.1} parent=5 // pred_fallthru
      _
    %p831 = scmp.le.s32.totalorder 2, %s15
    // Predicated region
    $region61: #{a_call__.1} parent=5 // pred_check
      %p832 = pneg %p831
    $region62: #{a_call__.1} parent=5 // pred_check_branch
      %834 = sbr.rel (%p832) target = $region64
    $region63: #{a_call__.1} parent=5 // pred_region
      %s835 = ssub.s32 %s15, 2
      // Predicated region
      $region65: #{a_call__.1} parent=63 // pred_check
        %p836 = pneg %p259
      $region66: #{a_call__.1} parent=63 // pred_check_branch
        %838 = sbr.rel (%p836) target = $region68
      $region67: #{a_call__.1} parent=63 // pred_region
        %s839 = smul.u32 2, %s26
        %p840 = scmp.lt.s32.totalorder %s27, 1
        %s841 = scalar_select %p840, %s27, 1
        %p842 = scmp.lt.s32.totalorder %s839, 1
        %s843 = scalar_select %p842, %s839, 1
        %s844 = smul.addr %s841, 2
        %s845 = sadd.s32 %s843, %s844
        %s846 = smul.addr %s845, 4
        %s847 = scalar_lea.vmem %s9, %s846
      $region68: #{a_call__.1} parent=63 // pred_fallthru
        _
    $region64: #{a_call__.1} parent=5 // pred_fallthru
      _
  $region6: #{a_call__.1} parent=0 // loop_footer
    %s19 = sadd.s32 1, %s15
  $region7: #{a_call__.1} parent=0 // loop_footer_branch
    %14 = sbr.rel target = $region3
  $region8: #{a_call__.1} parent=0 // loop_exit
    _

</llo_original>
